<compile_context>
chip_gen: v5e
topology: v5e:2x2
jax: 0.10.0
libtpu: 0.0.40
codegen_flags: <defaults>
</compile_context>

<pallas_src>
import functools

import jax
import jax.numpy as jnp
from jax.experimental import pallas as pl
from jax.experimental.pallas import tpu as pltpu


def _round_up(n: int, m: int) -> int:
    return -(-n // m) * m


def _vmem_capacity_bytes() -> int:
    """Trace-time per-core VMEM capacity; conservative fallback = v7x (64 MiB)."""
    try:
        return int(pltpu.get_tpu_info().vmem_capacity_bytes)
    except Exception:
        return 64 << 20


def _pick_batch_block(B: int, per_sample_bytes: int, target_bytes: int) -> int:
    """Largest batch block that (a) keeps a block near `target_bytes` and
    (b) leaves >= 4 grid steps when B allows (>= 2 otherwise) so the software
    pipeline overlaps DMA with compute and both TensorCores get work."""
    bb = max(1, min(B, target_bytes // max(per_sample_bytes, 1)))
    if B >= 4:
        bb = min(bb, max(1, B // 4))
    elif B >= 2:
        bb = min(bb, max(1, B // 2))
    return int(bb)


def _se_kernel(x_ref, w1t_ref, w2t_ref, o_ref, *, inv_hw):
    # x_ref : (Bb, C, HW)   input tile (no spatial padding)
    # w1t_ref: (C, CrP)     fc1 weight, transposed + lane-padded (resident)
    # w2t_ref: (CrP, C)     fc2 weight, transposed + lane-padded (resident)
    # o_ref : (Bb, C, HW)   output tile

    # Squeeze: spatial mean with an f32 accumulator, without materializing a
    # full-size f32 copy of the tile.
    y = jnp.sum(x_ref[...], axis=-1, dtype=jnp.float32) * inv_hw      # (Bb, C)

    # Excitation: Linear -> ReLU -> Linear -> Sigmoid (bias-free).
    # Operands in the weight dtype (bf16 for a bf16 model), f32 accumulation.
    w_dtype = w1t_ref.dtype
    h = jnp.dot(y.astype(w_dtype), w1t_ref[...],
                preferred_element_type=jnp.float32)
    h = jnp.maximum(h, 0.0)                                           # (Bb, CrP)
    s = jnp.dot(h.astype(w_dtype), w2t_ref[...],
                preferred_element_type=jnp.float32)
    s = jax.nn.sigmoid(s)                                             # (Bb, C)

    # Scale: re-read the tile (vld slots are cheap), broadcast the per-channel
    # gate over the lane axis and store in the native dtype.
    x = x_ref[...]
    o_ref[...] = (x * s[:, :, None].astype(x.dtype)).astype(o_ref.dtype)


@jax.jit
def se_block(x, w1, w2):
    """x: (B, C, H, W); w1: (C//r, C); w2: (C, C//r) (PyTorch Linear layout)."""
    B, C, H, W = x.shape
    Cr = w1.shape[0]
    HW = H * W
    CrP = _round_up(Cr, 128)          # lane-dense excitation hidden dim
    itemsize = x.dtype.itemsize

    # Per-generation block sizing: ~4 MiB blocks keep the double-buffered
    # footprint (2x in + 2x out ~= 16 MiB) comfortably inside every
    # generation's VMEM (64 MiB/TC on v7x, 128 MiB on v5e/v6e).
    vmem_cap = _vmem_capacity_bytes()
    target_bytes = max(2 << 20, min(4 << 20, vmem_cap // 16))
    Bb = _pick_batch_block(B, C * HW * itemsize, target_bytes)
    vmem_limit = int(min(64 << 20, (vmem_cap * 3) // 4))

    # Flatten NCHW -> (B, C, HW): a free bitcast, no HBM pass.
    x_flat = x.reshape(B, C, HW)

    # Transpose + zero-pad the excitation weights once, in the activation
    # dtype (bf16 weights for bf16 models halve the resident footprint and
    # avoid multi-pass f32 MXU operands).  Padding is exact: extra columns of
    # w1t give h == 0 after ReLU and the matching zero rows of w2t add 0.
    w_dtype = x.dtype if x.dtype in (jnp.bfloat16, jnp.float32) else jnp.float32
    w1t = jnp.zeros((C, CrP), w_dtype).at[:, :Cr].set(w1.T.astype(w_dtype))
    w2t = jnp.zeros((CrP, C), w_dtype).at[:Cr, :].set(w2.T.astype(w_dtype))
    w_itemsize = jnp.dtype(w_dtype).itemsize

    cost = pl.CostEstimate(
        flops=int(2 * 2 * B * C * CrP + 2 * B * C * HW),
        transcendentals=int(B * C),
        bytes_accessed=int(2 * B * C * HW * itemsize + 2 * C * CrP * w_itemsize),
    )

    out_flat = pl.pallas_call(
        functools.partial(_se_kernel, inv_hw=1.0 / HW),
        out_shape=jax.ShapeDtypeStruct((B, C, HW), x.dtype),
        grid=(pl.cdiv(B, Bb),),
        in_specs=[
            pl.BlockSpec((Bb, C, HW), lambda i: (i, 0, 0)),
            # Constant index maps -> weights fetched once and kept resident.
            pl.BlockSpec((C, CrP), lambda i: (0, 0)),
            pl.BlockSpec((CrP, C), lambda i: (0, 0)),
        ],
        out_specs=pl.BlockSpec((Bb, C, HW), lambda i: (i, 0, 0)),
        compiler_params=pltpu.CompilerParams(
            dimension_semantics=("parallel",),   # shard grid steps across TCs
            vmem_limit_bytes=vmem_limit,
        ),
        cost_estimate=cost,
    )(x_flat, w1t, w2t)

    return out_flat.reshape(B, C, H, W)


def se_block_ref(x, w1, w2):
    """Pure-JAX reference mirroring the PyTorch forward."""
    y = jnp.mean(x, axis=(2, 3))                 # (B, C)
    y = jnp.maximum(y @ w1.T, 0.0)               # (B, C//r)
    y = jax.nn.sigmoid(y @ w2.T)                 # (B, C)
    return x * y[:, :, None, None]


if __name__ == "__main__":
    # SEBlock(channel=32, reduction=4) -> hidden = 8
    B, C, H, W = 2, 32, 16, 16
    reduction = 4
    Cr = C // reduction

    key = jax.random.PRNGKey(0)
    kx, k1, k2 = jax.random.split(key, 3)

    x = jax.random.normal(kx, (B, C, H, W), dtype=jnp.float32)
    # nn.Linear default init: U(-1/sqrt(fan_in), 1/sqrt(fan_in)), no bias.
    w1 = jax.random.uniform(k1, (Cr, C), jnp.float32,
                            minval=-1.0 / jnp.sqrt(C), maxval=1.0 / jnp.sqrt(C))
    w2 = jax.random.uniform(k2, (C, Cr), jnp.float32,
                            minval=-1.0 / jnp.sqrt(Cr), maxval=1.0 / jnp.sqrt(Cr))

    out = se_block(x, w1, w2)
    out = jax.block_until_ready(out)

    ref = se_block_ref(x, w1, w2)
    assert out.shape == (B, C, H, W)
    assert jnp.allclose(out, ref, atol=1e-5, rtol=1e-5)

    print("KERNEL_OK")
</pallas_src>

<mosaic_0001>
module attributes {stable_mosaic.version = 11 : i64} {
  func.func @_se_kernel(%arg0: i32, %arg1: memref<1x32x256xf32, #tpu.memory_space<vmem>>, %arg2: memref<32x128xf32, #tpu.memory_space<vmem>>, %arg3: memref<128x32xf32, #tpu.memory_space<vmem>>, %arg4: memref<1x32x256xf32, #tpu.memory_space<vmem>>) attributes {dimension_semantics = [#tpu.dimension_semantics<parallel>], iteration_bounds = array<i64: 2>, scalar_prefetch = 0 : i64, scratch_operands = 0 : i64, tpu.core_type = #tpu.core_type<tc>, window_params = [{transform_indices = @transform_0, window_bounds = array<i64: 1, 32, 256>}, {pipeline_mode = #tpu.pipeline_mode<synchronous>, transform_indices = @transform_1, window_bounds = array<i64: 32, 128>}, {pipeline_mode = #tpu.pipeline_mode<synchronous>, transform_indices = @transform_2, window_bounds = array<i64: 128, 32>}, {transform_indices = @transform_3, window_bounds = array<i64: 1, 32, 256>}]} {
    %c0 = arith.constant 0 : index
    %c0_0 = arith.constant 0 : index
    %c0_1 = arith.constant 0 : index
    %0 = vector.load %arg1[%c0, %c0_0, %c0_1] : memref<1x32x256xf32, #tpu.memory_space<vmem>>, vector<1x32x256xf32>
    %cst = arith.constant dense<0.000000e+00> : vector<1x32xf32>
    %1 = vector.multi_reduction <add>, %0, %cst [2] : vector<1x32x256xf32> to vector<1x32xf32>
    %cst_2 = arith.constant 3.906250e-03 : f32
    %2 = vector.broadcast %cst_2 : f32 to vector<1x32xf32>
    %3 = arith.mulf %1, %2 : vector<1x32xf32>
    %c0_3 = arith.constant 0 : index
    %c0_4 = arith.constant 0 : index
    %4 = vector.load %arg2[%c0_3, %c0_4] : memref<32x128xf32, #tpu.memory_space<vmem>>, vector<32x128xf32>
    %cst_5 = arith.constant dense<0.000000e+00> : vector<1x128xf32>
    %5 = tpu.matmul %3, %4, %cst_5 {dimension_numbers = #tpu.dot_dimension_numbers<[1], [0], [0], [1], [0, 0, 1, 1], [], []>} : vector<1x32xf32>, vector<32x128xf32>, vector<1x128xf32> -> vector<1x128xf32>
    %cst_6 = arith.constant 0.000000e+00 : f32
    %6 = vector.broadcast %cst_6 : f32 to vector<1x128xf32>
    %7 = arith.maximumf %5, %6 : vector<1x128xf32>
    %c0_7 = arith.constant 0 : index
    %c0_8 = arith.constant 0 : index
    %8 = vector.load %arg3[%c0_7, %c0_8] : memref<128x32xf32, #tpu.memory_space<vmem>>, vector<128x32xf32>
    %cst_9 = arith.constant dense<0.000000e+00> : vector<1x32xf32>
    %9 = tpu.matmul %7, %8, %cst_9 {dimension_numbers = #tpu.dot_dimension_numbers<[1], [0], [0], [1], [0, 0, 1, 1], [], []>} : vector<1x128xf32>, vector<128x32xf32>, vector<1x32xf32> -> vector<1x32xf32>
    %10 = arith.negf %9 : vector<1x32xf32>
    %11 = math.exp %10 : vector<1x32xf32>
    %cst_10 = arith.constant 1.000000e+00 : f32
    %12 = vector.broadcast %cst_10 : f32 to vector<1x32xf32>
    %13 = arith.addf %12, %11 : vector<1x32xf32>
    %14 = arith.divf %12, %13 : vector<1x32xf32>
    %c0_11 = arith.constant 0 : index
    %c0_12 = arith.constant 0 : index
    %c0_13 = arith.constant 0 : index
    %15 = vector.load %arg1[%c0_11, %c0_12, %c0_13] : memref<1x32x256xf32, #tpu.memory_space<vmem>>, vector<1x32x256xf32>
    %16 = vector.shape_cast %14 : vector<1x32xf32> to vector<1x32x1xf32>
    %17 = vector.broadcast %16 : vector<1x32x1xf32> to vector<1x32x256xf32>
    %18 = arith.mulf %15, %17 : vector<1x32x256xf32>
    %c0_14 = arith.constant 0 : index
    %c0_15 = arith.constant 0 : index
    %c0_16 = arith.constant 0 : index
    %19 = vector.load %arg4[%c0_14, %c0_15, %c0_16] : memref<1x32x256xf32, #tpu.memory_space<vmem>>, vector<1x32x256xf32>
    tpu.vector_store %arg4[%c0_14, %c0_15, %c0_16], %18 {strides = array<i32>} : memref<1x32x256xf32, #tpu.memory_space<vmem>>, vector<1x32x256xf32>,
    return
  }
  func.func @transform_0(%arg0: i32) -> (i32, i32, i32) {
    %c0_i32 = arith.constant 0 : i32
    %c0_i32_0 = arith.constant 0 : i32
    %c0_i32_1 = arith.constant 0 : i32
    return %arg0, %c0_i32, %c0_i32_0 : i32, i32, i32
  }
  func.func @transform_1(%arg0: i32) -> (i32, i32) {
    %c0_i32 = arith.constant 0 : i32
    %c0_i32_0 = arith.constant 0 : i32
    %c0_i32_1 = arith.constant 0 : i32
    return %c0_i32, %c0_i32_0 : i32, i32
  }
  func.func @transform_2(%arg0: i32) -> (i32, i32) {
    %c0_i32 = arith.constant 0 : i32
    %c0_i32_0 = arith.constant 0 : i32
    %c0_i32_1 = arith.constant 0 : i32
    return %c0_i32, %c0_i32_0 : i32, i32
  }
  func.func @transform_3(%arg0: i32) -> (i32, i32, i32) {
    %c0_i32 = arith.constant 0 : i32
    %c0_i32_0 = arith.constant 0 : i32
    %c0_i32_1 = arith.constant 0 : i32
    return %arg0, %c0_i32, %c0_i32_0 : i32, i32, i32
  }
}

</mosaic_0001>

<llo_original>
// kernel: se_block.1
$region0: #{se_block.1}
  #allocation0 [shape = 'u32[]', space=smem, size = 0x4, offset = 0x4, fixed_abs, tag = 'smem constant byte address 0x4 - core index']
  #allocation1 [shape = 'u32[72,128]{1,0:T(1,128)}', space=vmem, size = 0x9000, scoped, tag = 'internal scratch']
  %s0 = inlined_call_operand.vmem [shape: f32[2,32,256], index: 0, kind: input, shape index: {}]
  %s1 = inlined_call_operand.vmem [shape: f32[32,128], index: 1, kind: input, shape index: {}]
  %s2 = inlined_call_operand.vmem [shape: f32[128,32], index: 2, kind: input, shape index: {}]
  %s3 = inlined_call_operand.vmem [shape: f32[2,32,256], index: 3, kind: output, shape index: {}]
  %s4 = sld [smem:[#allocation0]]
  $region45: #{se_block.1} parent=0
    _
  %s6 = ssub.s32 1, %s4
  %s7 = scalar_select 0, %s6, %s4
  loop: start=0, step=1, limit=4
  $region2: #{se_block.1} parent=0 // loop_pre_header
    _
  $region3: #{se_block.1} parent=0 // loop_header
    %s9 = sphi 0, %s13
    %p10 = scmp.ge.s32.totalorder %s9, 4
    %s19 = sphi 0, %s21
    %s22 = sphi 0, %s19
    %s23 = sphi 0, %s22
    %s39 = sphi 0, %s23
    %s43 = sphi 0, %s43
    %s45 = sphi 0, %s43
    %s46 = sphi 0, %s45
    %s60 = sphi 0, %s46
    %s64 = sphi 0, %s64
    %s66 = sphi 0, %s64
    %s67 = sphi 0, %s66
    %s81 = sphi 0, %s67
    %s87 = sphi 0, %s89
    %s90 = sphi 0, %s87
    %s91 = sphi 0, %s90
    %s107 = sphi 0, %s91
  $region4: #{se_block.1} parent=0 // loop_header_branch
    %12 = sbr.rel (%p10) target = $region8
  $region5: #{se_block.1} parent=0 // loop_body
    %s14 = ssub.s32 %s9, 1
    %s15 = ssub.s32 %s9, 2
    %s16 = sadd.s32 %s9, 1
    %s17 = ssub.s32 %s9, %s16
    %p18 = scmp.eq.s32.totalorder %s17, 0
    %s20 = sadd.s32 %s19, 1
    %s21 = scalar_select %p18, %s19, %s20
    %p24 = pneg %p18
    %p25 = scmp.eq.s32.totalorder %s9, 1
    %p26 = por %p24, %p25
    %p27 = scmp.ne.s32.totalorder %s19, %s22
    %p28 = scmp.eq.s32.totalorder %s9, 0
    %p29 = por %p27, %p28
    %p30 = scmp.ne.s32.totalorder %s19, %s22
    %p31 = scmp.eq.s32.totalorder %s14, 1
    %p32 = por %p30, %p31
    %p33 = scmp.ne.s32.totalorder %s22, %s23
    %p34 = scmp.eq.s32.totalorder %s14, 0
    %p35 = por %p33, %p34
    %p36 = scmp.ne.s32.totalorder %s22, %s23
    %p37 = scmp.eq.s32.totalorder %s15, 1
    %p38 = por %p36, %p37
    %p40 = scmp.ne.s32.totalorder %s23, %s39
    %p41 = scmp.eq.s32.totalorder %s15, 0
    %p42 = por %p40, %p41
    %s44 = sadd.s32 %s43, 1
    %p47 = scmp.eq.s32.totalorder %s9, 1
    %p48 = scmp.ne.s32.totalorder %s43, %s45
    %p49 = scmp.eq.s32.totalorder %s9, 0
    %p50 = por %p48, %p49
    %p51 = scmp.ne.s32.totalorder %s43, %s45
    %p52 = scmp.eq.s32.totalorder %s14, 1
    %p53 = por %p51, %p52
    %p54 = scmp.ne.s32.totalorder %s45, %s46
    %p55 = scmp.eq.s32.totalorder %s14, 0
    %p56 = por %p54, %p55
    %p57 = scmp.ne.s32.totalorder %s45, %s46
    %p58 = scmp.eq.s32.totalorder %s15, 1
    %p59 = por %p57, %p58
    %p61 = scmp.ne.s32.totalorder %s46, %s60
    %p62 = scmp.eq.s32.totalorder %s15, 0
    %p63 = por %p61, %p62
    %s65 = sadd.s32 %s64, 1
    %p68 = scmp.eq.s32.totalorder %s9, 1
    %p69 = scmp.ne.s32.totalorder %s64, %s66
    %p70 = scmp.eq.s32.totalorder %s9, 0
    %p71 = por %p69, %p70
    %p72 = scmp.ne.s32.totalorder %s64, %s66
    %p73 = scmp.eq.s32.totalorder %s14, 1
    %p74 = por %p72, %p73
    %p75 = scmp.ne.s32.totalorder %s66, %s67
    %p76 = scmp.eq.s32.totalorder %s14, 0
    %p77 = por %p75, %p76
    %p78 = scmp.ne.s32.totalorder %s66, %s67
    %p79 = scmp.eq.s32.totalorder %s15, 1
    %p80 = por %p78, %p79
    %p82 = scmp.ne.s32.totalorder %s67, %s81
    %p83 = scmp.eq.s32.totalorder %s15, 0
    %p84 = por %p82, %p83
    %s85 = ssub.s32 %s9, %s16
    %p86 = scmp.eq.s32.totalorder %s85, 0
    %s88 = sadd.s32 %s87, 1
    %s89 = scalar_select %p86, %s87, %s88
    %p92 = pneg %p86
    %p93 = scmp.eq.s32.totalorder %s9, 1
    %p94 = por %p92, %p93
    %p95 = scmp.ne.s32.totalorder %s87, %s90
    %p96 = scmp.eq.s32.totalorder %s9, 0
    %p97 = por %p95, %p96
    %p98 = scmp.ne.s32.totalorder %s87, %s90
    %p99 = scmp.eq.s32.totalorder %s14, 1
    %p100 = por %p98, %p99
    %p101 = scmp.ne.s32.totalorder %s90, %s91
    %p102 = scmp.eq.s32.totalorder %s14, 0
    %p103 = por %p101, %p102
    %p104 = scmp.ne.s32.totalorder %s90, %s91
    %p105 = scmp.eq.s32.totalorder %s15, 1
    %p106 = por %p104, %p105
    %p108 = scmp.ne.s32.totalorder %s91, %s107
    %p109 = scmp.eq.s32.totalorder %s15, 0
    %p110 = por %p108, %p109
    %p111 = scmp.le.s32.totalorder 1, %s9
    %p112 = scmp.lt.s32.totalorder %s9, 3
    %p113 = pnand %p111, %p112
    %p114 = pneg %p113
    // Predicated region
    $region9: #{se_block.1} parent=5 // pred_check
      _
    $region10: #{se_block.1} parent=5 // pred_check_branch
      %116 = sbr.rel (%p113) target = $region12
    $region11: #{se_block.1} parent=5 // pred_region
      %s117 = ssub.s32 %s9, 1
      // Predicated region
      $region13: #{se_block.1} parent=11 // pred_check
        %p118 = pneg %p56
      $region14: #{se_block.1} parent=11 // pred_check_branch
        %120 = sbr.rel (%p118) target = $region16
      $region15: #{se_block.1} parent=11 // pred_region
        _
      $region16: #{se_block.1} parent=11 // pred_fallthru
        _
      // Predicated region
      $region17: #{se_block.1} parent=11 // pred_check
        %p121 = pneg %p77
      $region18: #{se_block.1} parent=11 // pred_check_branch
        %123 = sbr.rel (%p121) target = $region20
      $region19: #{se_block.1} parent=11 // pred_region
        _
      $region20: #{se_block.1} parent=11 // pred_fallthru
        _
    $region12: #{se_block.1} parent=5 // pred_fallthru
      _
    %p124 = scmp.lt.s32.totalorder %s9, 2
    // Predicated region
    $region21: #{se_block.1} parent=5 // pred_check
      %p125 = pneg %p124
    $region22: #{se_block.1} parent=5 // pred_check_branch
      %127 = sbr.rel (%p125) target = $region24
    $region23: #{se_block.1} parent=5 // pred_region
      // Predicated region
      $region25: #{se_block.1} parent=23 // pred_check
        %p128 = pneg %p29
      $region26: #{se_block.1} parent=23 // pred_check_branch
        %130 = sbr.rel (%p128) target = $region28
      $region27: #{se_block.1} parent=23 // pred_region
        %p131 = scmp.lt.s32.totalorder %s9, 1
        %s132 = scalar_select %p131, %s9, 1
        %s133 = smul.addr %s132, 8
        %s134 = smul.addr %s133, 8
        %s135 = scalar_lea.vmem %s0, %s134
      $region28: #{se_block.1} parent=23 // pred_fallthru
        _
    $region24: #{se_block.1} parent=5 // pred_fallthru
      _
    %p136 = scmp.le.s32.totalorder 1, %s9
    %p137 = scmp.lt.s32.totalorder %s9, 3
    %p138 = pnand %p136, %p137
    %p139 = pneg %p138
    // Predicated region
    $region29: #{se_block.1} parent=5 // pred_check
      _
    $region30: #{se_block.1} parent=5 // pred_check_branch
      %141 = sbr.rel (%p138) target = $region32
    $region31: #{se_block.1} parent=5 // pred_region
      %s142 = ssub.s32 %s9, 1
      %p143 = scmp.lt.s32.totalorder %s14, 1
      %s144 = scalar_select %p143, %s14, 1
      %s145 = smul.addr %s144, 8
      %s146 = smul.addr %s145, 8
      %s147 = scalar_lea.vmem %s0, %s146
      %p148 = pneg %p35
      %p149 = pneg %p32
      %p150 = pneg %p56
      %p151 = pneg %p53
      %p152 = pneg %p77
      %p153 = pneg %p74
      %p154 = pneg %p103
      %p155 = pneg %p100
      %p156 = scmp.lt.s32.totalorder %s14, 1
      %s157 = scalar_select %p156, %s14, 1
      %s158 = smul.addr %s157, 8
      %s159 = smul.addr %s158, 8
      %s160 = scalar_lea.vmem %s3, %s159
      %p161 = scmp.lt.s32.totalorder %s14, 1
      %s162 = scalar_select %p161, %s14, 1
      %s163 = smul.addr %s162, 8
      %s164 = smul.addr %s163, 8
      %s165 = scalar_lea.vmem %s0, %s164
      %p166 = scmp.lt.s32.totalorder %s14, 1
      %s167 = scalar_select %p166, %s14, 1
      %s168 = smul.addr %s167, 8
      %s169 = smul.addr %s168, 8
      %s170 = scalar_lea.vmem %s3, %s169
      %v171 = vld [vmem:[%s165] sm:$0xff]
      %v172 = vld [vmem:[%s165 + $0x8] sm:$0xff]
      %v173 = vld [vmem:[%s165 + $0x10] sm:$0xff]
      %v174 = vld [vmem:[%s165 + $0x18] sm:$0xff]
      %v175 = vld [vmem:[%s165 + $0x20] sm:$0xff]
      %v176 = vld [vmem:[%s165 + $0x28] sm:$0xff]
      %v177 = vld [vmem:[%s165 + $0x30] sm:$0xff]
      %v178 = vld [vmem:[%s165 + $0x38] sm:$0xff]
      %v179 = vadd.f32 %v171, %v172
      %180 = vadd.xlane.f32.xlu0 %v179
      %v181 = vpop.xlane.xlu0 %180
      %v182 = vadd.f32 %v173, %v174
      %183 = vadd.xlane.f32.xlu0 %v182
      %v184 = vpop.xlane.xlu0 %183
      %v185 = vadd.f32 %v175, %v176
      %186 = vadd.xlane.f32.xlu0 %v185
      %v187 = vpop.xlane.xlu0 %186
      %v188 = vadd.f32 %v177, %v178
      %189 = vadd.xlane.f32.xlu0 %v188
      %v190 = vpop.xlane.xlu0 %189
      %v191 = vmul.f32 %v181, 0.00390625
      %v192 = vmul.f32 %v184, 0.00390625
      %v193 = vmul.f32 %v187, 0.00390625
      %v194 = vmul.f32 %v190, 0.00390625
      %v195 = vld [vmem:[%s1] sm:$0xff]
      %v196 = vld [vmem:[%s1 + $0x8] sm:$0xff]
      %v197 = vld [vmem:[%s1 + $0x10] sm:$0xff]
      %v198 = vld [vmem:[%s1 + $0x18] sm:$0xff]
      %v203 = vlaneseq
      %v204 = vand.u32 %v203, 127
      %v205 = vperm.slane %v191, %v204
      %v206 = vadd.s32 %v204, 4294967288
      %v207 = vperm.slane %v192, %v206
      %vm208 = vcmask 130112
      %v209 = vsel %vm208, %v207, %v205
      %v210 = vadd.s32 %v204, 4294967280
      %v211 = vperm.slane %v193, %v210
      %vm212 = vcmask 195712
      %v213 = vsel %vm212, %v211, %v209
      %v214 = vadd.s32 %v204, 4294967272
      %v215 = vperm.slane %v194, %v214
      %vm216 = vcmask 261312
      %v217 = vsel %vm216, %v215, %v213
      %vm218 = vcmask 261120
      %v219 = vsel %vm218, %v217, 0
      %221 = vmatpush.msra.mxu0 0.0
      %222 = vmatpush.msra.mxu0 0.0
      %223 = vmatpush.msra.mxu0 0.0
      %224 = vmatpush.msra.mxu0 0.0
      %225 = vmatpush.msra.mxu0 0.0
      %226 = vmatpush.msra.mxu0 0.0
      %227 = vmatpush.msra.mxu0 0.0
      %228 = vmatpush.msra.mxu0 0.0
      %229 = vmatpush.msra.mxu0 0.0
      %230 = vmatpush.msra.mxu0 0.0
      %231 = vmatpush.msra.mxu0 0.0
      %232 = vmatpush.msra.mxu0 0.0
      %233 = vmatpush.msra.mxu0 %v198
      %234 = vmatpush.msra.mxu0 %v197
      %235 = vmatpush.msra.mxu0 %v196
      %236 = vmatpush.msra.mxu0 %v195
      %237 = vmatmul.f32.gmra.mxu0 %v219
      %v238 = vpop.f32.mrf.mxu0
      %v239 = vadd.f32 0.0, %v238
      %240 = vdwg.mxu0
      %v241 = vmax.f32 %v239, 0.0
      %v242 = vld [vmem:[%s2] sm:$0xff]
      %v243 = vld [vmem:[%s2 + $0x8] sm:$0xff]
      %v244 = vld [vmem:[%s2 + $0x10] sm:$0xff]
      %v245 = vld [vmem:[%s2 + $0x18] sm:$0xff]
      %v246 = vld [vmem:[%s2 + $0x20] sm:$0xff]
      %v247 = vld [vmem:[%s2 + $0x28] sm:$0xff]
      %v248 = vld [vmem:[%s2 + $0x30] sm:$0xff]
      %v249 = vld [vmem:[%s2 + $0x38] sm:$0xff]
      %v250 = vld [vmem:[%s2 + $0x40] sm:$0xff]
      %v251 = vld [vmem:[%s2 + $0x48] sm:$0xff]
      %v252 = vld [vmem:[%s2 + $0x50] sm:$0xff]
      %v253 = vld [vmem:[%s2 + $0x58] sm:$0xff]
      %v254 = vld [vmem:[%s2 + $0x60] sm:$0xff]
      %v255 = vld [vmem:[%s2 + $0x68] sm:$0xff]
      %v256 = vld [vmem:[%s2 + $0x70] sm:$0xff]
      %v257 = vld [vmem:[%s2 + $0x78] sm:$0xff]
      %258 = vmatpush.msra.mxu0 %v257
      %259 = vmatpush.msra.mxu0 %v256
      %260 = vmatpush.msra.mxu0 %v255
      %261 = vmatpush.msra.mxu0 %v254
      %262 = vmatpush.msra.mxu0 %v253
      %263 = vmatpush.msra.mxu0 %v252
      %264 = vmatpush.msra.mxu0 %v251
      %265 = vmatpush.msra.mxu0 %v250
      %266 = vmatpush.msra.mxu0 %v249
      %267 = vmatpush.msra.mxu0 %v248
      %268 = vmatpush.msra.mxu0 %v247
      %269 = vmatpush.msra.mxu0 %v246
      %270 = vmatpush.msra.mxu0 %v245
      %271 = vmatpush.msra.mxu0 %v244
      %272 = vmatpush.msra.mxu0 %v243
      %273 = vmatpush.msra.mxu0 %v242
      %274 = vmatmul.f32.gmra.mxu0 %v241
      %v275 = vpop.f32.mrf.mxu0
      %v276 = vadd.f32 0.0, %v275
      %277 = vdwg.mxu0
      %v278 = vxor.u32 %v276, 2147483648
      %v279 = vmul.f32 %v278, 1.442695
      %v280 = vpow.pop %v279
      %v281 = vadd.f32 %v280, 1.0
      %v282 = vrcp.pop %v281
      %v283 = vmul.f32 %v281, %v282
      %v284 = vsub.f32 1.0, %v283
      %v285 = vmul.f32 %v282, %v284
      %v286 = vadd.f32 %v282, %v285
      %vm287 = vweird.f32 %v281
      %vm288 = vweird.f32 %v282
      %vm289 = vmor %vm287, %vm288
      %v290 = vsel %vm289, %v282, %v286
      %v291 = vand.u32 2147483647, %v281
      %vm292 = vcmp.eq.f32.partialorder %v291, 8.507059e+37
      %v293 = vand.u32 %v281, 2147483648
      %v294 = vor.u32 1.1754944e-38, %v293
      %v295 = vsel %vm292, %v294, %v290
      %v296 = vmul.f32 1.0, %v295
      %v297 = vperm.slane %v296, 0
      %v298 = vlaneseq
      %v299 = vshrl.u32 %v298, 7
      %301 = vset.pattern.permute.xlu0 %v299
      %302 = vperm.xlu0 %301, %v297
      %v303 = vpop.permute.xlu0 %302
      %v304 = vlaneseq
      %v305 = vshrl.u32 %v304, 7
      %v306 = vadd.s32 %v305, 8
      %307 = vset.pattern.permute.xlu0 %v306
      %308 = vperm.xlu0 %307, %v297
      %v309 = vpop.permute.xlu0 %308
      %v310 = vlaneseq
      %v311 = vshrl.u32 %v310, 7
      %v312 = vadd.s32 %v311, 16
      %313 = vset.pattern.permute.xlu0 %v312
      %314 = vperm.xlu0 %313, %v297
      %v315 = vpop.permute.xlu0 %314
      %v316 = vlaneseq
      %v317 = vshrl.u32 %v316, 7
      %v318 = vadd.s32 %v317, 24
      %319 = vset.pattern.permute.xlu0 %v318
      %320 = vperm.xlu0 %319, %v297
      %v321 = vpop.permute.xlu0 %320
      %v322 = vmul.f32 %v171, %v303
      %v323 = vmul.f32 %v172, %v303
      %v324 = vmul.f32 %v173, %v309
      %v325 = vmul.f32 %v174, %v309
      %v326 = vmul.f32 %v175, %v315
      %v327 = vmul.f32 %v176, %v315
      %v328 = vmul.f32 %v177, %v321
      %v329 = vmul.f32 %v178, %v321
      %330 = vst [vmem:[%s170] sm:$0xff] %v322
      %331 = vst [vmem:[%s170 + $0x8] sm:$0xff] %v323
      %332 = vst [vmem:[%s170 + $0x10] sm:$0xff] %v324
      %333 = vst [vmem:[%s170 + $0x18] sm:$0xff] %v325
      %334 = vst [vmem:[%s170 + $0x20] sm:$0xff] %v326
      %335 = vst [vmem:[%s170 + $0x28] sm:$0xff] %v327
      %336 = vst [vmem:[%s170 + $0x30] sm:$0xff] %v328
      %337 = vst [vmem:[%s170 + $0x38] sm:$0xff] %v329
      %p338 = scmp.lt.s32.totalorder %s14, 1
      %s339 = scalar_select %p338, %s14, 1
      %s340 = smul.addr %s339, 8
      %s341 = smul.addr %s340, 8
      %s342 = scalar_lea.vmem %s3, %s341
      // Predicated region
      $region33: #{se_block.1} parent=31 // pred_check
        %p343 = pneg %p100
      $region34: #{se_block.1} parent=31 // pred_check_branch
        %345 = sbr.rel (%p343) target = $region36
      $region35: #{se_block.1} parent=31 // pred_region
        _
      $region36: #{se_block.1} parent=31 // pred_fallthru
        _
    $region32: #{se_block.1} parent=5 // pred_fallthru
      _
    %p346 = scmp.le.s32.totalorder 2, %s9
    // Predicated region
    $region37: #{se_block.1} parent=5 // pred_check
      %p347 = pneg %p346
    $region38: #{se_block.1} parent=5 // pred_check_branch
      %349 = sbr.rel (%p347) target = $region40
    $region39: #{se_block.1} parent=5 // pred_region
      %s350 = ssub.s32 %s9, 2
      // Predicated region
      $region41: #{se_block.1} parent=39 // pred_check
        %p351 = pneg %p106
      $region42: #{se_block.1} parent=39 // pred_check_branch
        %353 = sbr.rel (%p351) target = $region44
      $region43: #{se_block.1} parent=39 // pred_region
        %p354 = scmp.lt.s32.totalorder %s15, 1
        %s355 = scalar_select %p354, %s15, 1
        %s356 = smul.addr %s355, 8
        %s357 = smul.addr %s356, 8
        %s358 = scalar_lea.vmem %s3, %s357
      $region44: #{se_block.1} parent=39 // pred_fallthru
        _
    $region40: #{se_block.1} parent=5 // pred_fallthru
      _
  $region6: #{se_block.1} parent=0 // loop_footer
    %s13 = sadd.s32 1, %s9
  $region7: #{se_block.1} parent=0 // loop_footer_branch
    %8 = sbr.rel target = $region3
  $region8: #{se_block.1} parent=0 // loop_exit
    _

</llo_original>
